<compile_context>
chip_gen: v7x
topology: tpu7x:2x2x1
jax: 0.10.0
libtpu: 0.0.40
codegen_flags: <defaults>
</compile_context>

<pallas_src>
import jax
import jax.numpy as jnp
from jax import lax
from jax.experimental import pallas as pl
from jax.experimental.pallas import tpu as pltpu

EPS = 1e-5

# ConvTranspose2d(k=4, s=2, p=1): oy = 2*iy - 1 + ky.  For output parity d, the
# contributing (padded-input row offset, kernel row) pairs are:
_TAPS = {0: ((0, 3), (1, 1)),   # even outputs: (iy=m-1, ky=3), (iy=m,   ky=1)
         1: ((1, 2), (2, 0))}   # odd  outputs: (iy=m,   ky=2), (iy=m+1, ky=0)


def _tpu_generation():
    try:
        kind = jax.devices()[0].device_kind.lower()
    except Exception:
        return "unknown"
    for g in ("v7", "v6", "v5"):
        if g in kind:
            return g
    return "unknown"


def _pick_cout_tile(cout, gen):
    # v5e MXU is 4x128x128 -> M=256 gains nothing and doubles block VMEM there.
    cap = 128 if gen == "v5" else 256
    if cout <= cap:
        return cout
    for t in (cap, 128, 64, 32, 16, 8):
        if cout % t == 0:
            return t
    return cout


def _make_kernel(hw_real, hw_pad):
    inv_n = 1.0 / (4.0 * hw_real)
    n_extra = 4.0 * (hw_pad - hw_real)   # zero-padded lanes (per channel, all parities)

    def kernel(p_ref, w_ref, o_ref, y_scr):
        # p_ref: (1, 4, K, HWp) bf16 parity patches (K = tap*Cin + ci)
        # w_ref: (4, Ct, K)     bf16 per-parity weight slab for this Cout tile
        # o_ref: (1, 4, Ct, HWp) bf16 normalized + ReLU'd output (lane dim = HWp)
        # y_scr: (4, Ct, HWp)   f32 VMEM staging for the raw GEMM results

        # Pass 1: per-parity GEMM (MXU, f32 acc) -> stage to scratch, accumulate sum.
        s1 = None
        for p in range(4):
            y_p = jnp.dot(w_ref[p], p_ref[0, p],
                          preferred_element_type=jnp.float32)      # (Ct, HWp) f32
            y_scr[p] = y_p
            part = jnp.sum(y_p, axis=1, keepdims=True)             # (Ct, 1)
            s1 = part if s1 is None else s1 + part
        mean = s1 * inv_n                                          # (Ct, 1)

        # Pass 2: centered (two-pass) variance -- avoids E[y^2]-E[y]^2 cancellation.
        ssq = None
        for p in range(4):
            d = y_scr[p] - mean
            part = jnp.sum(d * d, axis=1, keepdims=True)
            ssq = part if ssq is None else ssq + part
        if n_extra:
            # padded lanes hold exact zeros -> each contributed mean^2; remove them.
            ssq = ssq - n_extra * (mean * mean)
        var = jnp.maximum(ssq * inv_n, 0.0)
        inv_std = lax.rsqrt(var + EPS)

        # Pass 3: normalize + ReLU, cast to bf16 at the store only.
        for p in range(4):
            yn = (y_scr[p] - mean) * inv_std
            o_ref[0, p] = jnp.maximum(yn, 0.0).astype(o_ref.dtype)

    return kernel


def _parity_patches(x, hw_pad):
    """(N, Cin, H, W) -> (N, 4, 4*Cin, HWp) bf16; parity p = 2*dy + dx."""
    n, cin, h, w = x.shape
    hw = h * w
    xb = x.astype(jnp.bfloat16)                       # cast BEFORE pad/stack
    xp = jnp.pad(xb, ((0, 0), (0, 0), (1, 1), (1, 1)))
    parities = []
    for dy in (0, 1):
        for dx in (0, 1):
            cols = [xp[:, :, sy:sy + h, sx:sx + w]
                    for sy, _ in _TAPS[dy] for sx, _ in _TAPS[dx]]   # 4 x (N,Cin,H,W)
            pp = jnp.stack(cols, axis=1)                             # (N,4,Cin,H,W)
            parities.append(pp.reshape(n, 4 * cin, hw))
    p = jnp.stack(parities, axis=1)                                  # (N,4,4Cin,HW)
    if hw_pad != hw:
        p = jnp.pad(p, ((0, 0), (0, 0), (0, 0), (0, hw_pad - hw)))
    return p


def _parity_weights(weight_ct):
    """PyTorch ConvTranspose2d weight (Cin, Cout, 4, 4) -> (4, Cout, 4*Cin) bf16."""
    cin, cout = weight_ct.shape[:2]
    wb = weight_ct.astype(jnp.bfloat16)
    parities = []
    for dy in (0, 1):
        for dx in (0, 1):
            taps = [wb[:, :, ky, kx].T                               # (Cout, Cin)
                    for _, ky in _TAPS[dy] for _, kx in _TAPS[dx]]
            parities.append(jnp.stack(taps, axis=1).reshape(cout, 4 * cin))
    return jnp.stack(parities, axis=0)                               # (4,Cout,4Cin)


def unet_up(x, skip_input, weight_ct):
    """x: (N, Cin, H, W) NCHW.  skip_input: (N, Cs, 2H, 2W) or None.
    weight_ct: PyTorch ConvTranspose2d weight, shape (Cin, Cout, 4, 4)."""
    n, cin, h, w = x.shape
    cout = weight_ct.shape[1]
    hw, k = h * w, 4 * cin
    hw_pad = 128 if hw < 128 else hw          # lane-dense guard (full-width vst)

    gen = _tpu_generation()
    ct = _pick_cout_tile(cout, gen)
    grid = (n, cout // ct)

    patches = _parity_patches(x, hw_pad)      # (N, 4, K, HWp) bf16
    w_par = _parity_weights(weight_ct)        # (4, Cout, K)   bf16

    # VMEM budget from the actual block sizes (+ pipeline buffers + scratch + margin).
    patch_bufs = 1 if gen == "v7" else 2
    needed = (4 * k * hw_pad * 2 * patch_bufs      # patch block(s), bf16
              + 4 * ct * k * 2 * 2                 # weight block, double-buffered
              + 4 * ct * hw_pad * 2 * 2            # output block, double-buffered
              + 4 * ct * hw_pad * 4                # f32 staging scratch
              + (2 << 20))                         # compiler headroom
    gen_cap = (56 << 20) if gen == "v7" else (100 << 20)
    vmem_limit = min(max(needed, 16 << 20), gen_cap)

    patch_kwargs = {}
    if gen == "v7":
        # Patch block index is invariant along the c axis -> single-buffer it on v7x
        # (64 MiB VMEM); the exposed DMA happens once per batch step only.
        patch_kwargs["pipeline_mode"] = pl.Buffered(1)

    # Prefer splitting cores over batch (disjoint patch reads) rather than over c.
    dims = ("parallel", "arbitrary") if n > 1 else ("parallel", "parallel")

    y = pl.pallas_call(
        _make_kernel(hw, hw_pad),
        out_shape=jax.ShapeDtypeStruct((n, 4, cout, hw_pad), jnp.bfloat16),
        grid_spec=pltpu.PrefetchScalarGridSpec(
            num_scalar_prefetch=0,
            grid=grid,
            in_specs=[
                pl.BlockSpec((1, 4, k, hw_pad), lambda b, c: (b, 0, 0, 0),
                             **patch_kwargs),
                pl.BlockSpec((4, ct, k), lambda b, c: (0, c, 0)),
            ],
            out_specs=pl.BlockSpec((1, 4, ct, hw_pad), lambda b, c: (b, 0, c, 0)),
            scratch_shapes=[pltpu.VMEM((4, ct, hw_pad), jnp.float32)],
        ),
        compiler_params=pltpu.CompilerParams(
            dimension_semantics=dims,
            vmem_limit_bytes=vmem_limit),
    )(patches, w_par)

    # Interleave the 4 parities back into NCHW (single fused XLA pass, bf16).
    if hw_pad != hw:
        y = y[..., :hw]
    y = y.reshape(n, 2, 2, cout, h, w)                   # (N, dy, dx, C, H, W)
    y = jnp.transpose(y, (0, 3, 4, 1, 5, 2))             # (N, C, H, dy, W, dx)
    y = y.reshape(n, cout, 2 * h, 2 * w)

    if skip_input is not None:
        y = jnp.concatenate([y, skip_input.astype(y.dtype)], axis=1)
    return y


def _reference(x, skip_input, weight_ct):
    """Pure-JAX reference.  GEMM operands bf16-rounded (matching the kernel inputs);
    accumulation / InstanceNorm in exact f32."""
    xb = x.astype(jnp.bfloat16).astype(jnp.float32)
    wb = weight_ct.astype(jnp.bfloat16).astype(jnp.float32)
    w_conv = jnp.transpose(wb[:, :, ::-1, ::-1], (1, 0, 2, 3))       # OIHW
    y = lax.conv_general_dilated(
        xb, w_conv, window_strides=(1, 1), padding=((2, 2), (2, 2)),
        lhs_dilation=(2, 2),
        dimension_numbers=("NCHW", "OIHW", "NCHW"),
        precision=lax.Precision.HIGHEST)
    mean = jnp.mean(y, axis=(2, 3), keepdims=True)
    var = jnp.mean((y - mean) ** 2, axis=(2, 3), keepdims=True)
    y = jnp.maximum((y - mean) * lax.rsqrt(var + EPS), 0.0)
    if skip_input is not None:
        y = jnp.concatenate([y, skip_input.astype(y.dtype)], axis=1)
    return y


if __name__ == "__main__":
    key = jax.random.PRNGKey(0)
    k_x, k_s, k_w, k_x2, k_w2 = jax.random.split(key, 5)

    # Main test: lane-dense HW (=256) path, with skip concat.
    N, Cin, Cout, H, W = 2, 8, 16, 16, 16
    x = jax.random.normal(k_x, (N, Cin, H, W), dtype=jnp.float32)
    skip = jax.random.normal(k_s, (N, Cout, 2 * H, 2 * W), dtype=jnp.float32)
    weight_ct = 0.1 * jax.random.normal(k_w, (Cin, Cout, 4, 4), dtype=jnp.float32)

    out = jax.block_until_ready(unet_up(x, skip, weight_ct))
    assert out.shape == (N, 2 * Cout, 2 * H, 2 * W), out.shape
    ref = jax.block_until_ready(_reference(x, skip, weight_ct))
    err = float(jnp.max(jnp.abs(out.astype(jnp.float32) - ref)))
    assert err < 3e-2, err   # bf16 output rounding dominates the tolerance

    # Small-spatial test: HW (=64) < 128 exercises the lane-padding path; no skip.
    N2, Cin2, Cout2, H2, W2 = 2, 4, 8, 8, 8
    x2 = jax.random.normal(k_x2, (N2, Cin2, H2, W2), dtype=jnp.float32)
    w2 = 0.1 * jax.random.normal(k_w2, (Cin2, Cout2, 4, 4), dtype=jnp.float32)
    out2 = jax.block_until_ready(unet_up(x2, None, w2))
    assert out2.shape == (N2, Cout2, 2 * H2, 2 * W2), out2.shape
    ref2 = jax.block_until_ready(_reference(x2, None, w2))
    err2 = float(jnp.max(jnp.abs(out2.astype(jnp.float32) - ref2)))
    assert err2 < 3e-2, err2

    print("KERNEL_OK")
</pallas_src>

<mosaic_0001>
module attributes {stable_mosaic.version = 11 : i64} {
  func.func @kernel(%arg0: i32, %arg1: i32, %arg2: memref<1x4x32x256xbf16, #tpu.memory_space<vmem>>, %arg3: memref<4x16x32xbf16, #tpu.memory_space<vmem>>, %arg4: memref<1x4x16x256xbf16, #tpu.memory_space<vmem>>, %arg5: memref<4x16x256xf32, #tpu.memory_space<vmem>>) attributes {dimension_semantics = [#tpu.dimension_semantics<parallel>, #tpu.dimension_semantics<arbitrary>], iteration_bounds = array<i64: 2, 1>, scalar_prefetch = 0 : i64, scratch_operands = 1 : i64, tpu.core_type = #tpu.core_type<tc>, window_params = [{transform_indices = @transform_0, window_bounds = array<i64: 1, 4, 32, 256>}, {transform_indices = @transform_1, window_bounds = array<i64: 4, 16, 32>}, {transform_indices = @transform_2, window_bounds = array<i64: 1, 4, 16, 256>}]} {
    %c0 = arith.constant 0 : index
    %c0_0 = arith.constant 0 : index
    %c0_1 = arith.constant 0 : index
    %0 = vector.load %arg3[%c0, %c0_0, %c0_1] : memref<4x16x32xbf16, #tpu.memory_space<vmem>>, vector<1x16x32xbf16>
    %1 = vector.shape_cast %0 : vector<1x16x32xbf16> to vector<16x32xbf16>
    %c0_2 = arith.constant 0 : index
    %c0_3 = arith.constant 0 : index
    %c0_4 = arith.constant 0 : index
    %c0_5 = arith.constant 0 : index
    %2 = vector.load %arg2[%c0_2, %c0_3, %c0_4, %c0_5] : memref<1x4x32x256xbf16, #tpu.memory_space<vmem>>, vector<1x1x32x256xbf16>
    %3 = vector.shape_cast %2 : vector<1x1x32x256xbf16> to vector<32x256xbf16>
    %cst = arith.constant dense<0.000000e+00> : vector<16x256xf32>
    %4 = tpu.matmul %1, %3, %cst {dimension_numbers = #tpu.dot_dimension_numbers<[1], [0], [0], [1], [0, 0, 1, 1], [], []>} : vector<16x32xbf16>, vector<32x256xbf16>, vector<16x256xf32> -> vector<16x256xf32>
    %c0_6 = arith.constant 0 : index
    %c0_7 = arith.constant 0 : index
    %c0_8 = arith.constant 0 : index
    %5 = vector.load %arg5[%c0_6, %c0_7, %c0_8] : memref<4x16x256xf32, #tpu.memory_space<vmem>>, vector<1x16x256xf32>
    %6 = vector.shape_cast %5 : vector<1x16x256xf32> to vector<16x256xf32>
    %7 = vector.shape_cast %4 : vector<16x256xf32> to vector<1x16x256xf32>
    tpu.vector_store %arg5[%c0_6, %c0_7, %c0_8], %7 {strides = array<i32>} : memref<4x16x256xf32, #tpu.memory_space<vmem>>, vector<1x16x256xf32>,
    %cst_9 = arith.constant dense<0.000000e+00> : vector<16xf32>
    %8 = vector.multi_reduction <add>, %4, %cst_9 [1] : vector<16x256xf32> to vector<16xf32>
    %9 = vector.shape_cast %8 : vector<16xf32> to vector<16x1xf32>
    %c1 = arith.constant 1 : index
    %c0_10 = arith.constant 0 : index
    %c0_11 = arith.constant 0 : index
    %10 = vector.load %arg3[%c1, %c0_10, %c0_11] : memref<4x16x32xbf16, #tpu.memory_space<vmem>>, vector<1x16x32xbf16>
    %11 = vector.shape_cast %10 : vector<1x16x32xbf16> to vector<16x32xbf16>
    %c0_12 = arith.constant 0 : index
    %c1_13 = arith.constant 1 : index
    %c0_14 = arith.constant 0 : index
    %c0_15 = arith.constant 0 : index
    %12 = vector.load %arg2[%c0_12, %c1_13, %c0_14, %c0_15] : memref<1x4x32x256xbf16, #tpu.memory_space<vmem>>, vector<1x1x32x256xbf16>
    %13 = vector.shape_cast %12 : vector<1x1x32x256xbf16> to vector<32x256xbf16>
    %cst_16 = arith.constant dense<0.000000e+00> : vector<16x256xf32>
    %14 = tpu.matmul %11, %13, %cst_16 {dimension_numbers = #tpu.dot_dimension_numbers<[1], [0], [0], [1], [0, 0, 1, 1], [], []>} : vector<16x32xbf16>, vector<32x256xbf16>, vector<16x256xf32> -> vector<16x256xf32>
    %c1_17 = arith.constant 1 : index
    %c0_18 = arith.constant 0 : index
    %c0_19 = arith.constant 0 : index
    %15 = vector.load %arg5[%c1_17, %c0_18, %c0_19] : memref<4x16x256xf32, #tpu.memory_space<vmem>>, vector<1x16x256xf32>
    %16 = vector.shape_cast %15 : vector<1x16x256xf32> to vector<16x256xf32>
    %17 = vector.shape_cast %14 : vector<16x256xf32> to vector<1x16x256xf32>
    tpu.vector_store %arg5[%c1_17, %c0_18, %c0_19], %17 {strides = array<i32>} : memref<4x16x256xf32, #tpu.memory_space<vmem>>, vector<1x16x256xf32>,
    %cst_20 = arith.constant dense<0.000000e+00> : vector<16xf32>
    %18 = vector.multi_reduction <add>, %14, %cst_20 [1] : vector<16x256xf32> to vector<16xf32>
    %19 = vector.shape_cast %18 : vector<16xf32> to vector<16x1xf32>
    %20 = arith.addf %9, %19 : vector<16x1xf32>
    %c2 = arith.constant 2 : index
    %c0_21 = arith.constant 0 : index
    %c0_22 = arith.constant 0 : index
    %21 = vector.load %arg3[%c2, %c0_21, %c0_22] : memref<4x16x32xbf16, #tpu.memory_space<vmem>>, vector<1x16x32xbf16>
    %22 = vector.shape_cast %21 : vector<1x16x32xbf16> to vector<16x32xbf16>
    %c0_23 = arith.constant 0 : index
    %c2_24 = arith.constant 2 : index
    %c0_25 = arith.constant 0 : index
    %c0_26 = arith.constant 0 : index
    %23 = vector.load %arg2[%c0_23, %c2_24, %c0_25, %c0_26] : memref<1x4x32x256xbf16, #tpu.memory_space<vmem>>, vector<1x1x32x256xbf16>
    %24 = vector.shape_cast %23 : vector<1x1x32x256xbf16> to vector<32x256xbf16>
    %cst_27 = arith.constant dense<0.000000e+00> : vector<16x256xf32>
    %25 = tpu.matmul %22, %24, %cst_27 {dimension_numbers = #tpu.dot_dimension_numbers<[1], [0], [0], [1], [0, 0, 1, 1], [], []>} : vector<16x32xbf16>, vector<32x256xbf16>, vector<16x256xf32> -> vector<16x256xf32>
    %c2_28 = arith.constant 2 : index
    %c0_29 = arith.constant 0 : index
    %c0_30 = arith.constant 0 : index
    %26 = vector.load %arg5[%c2_28, %c0_29, %c0_30] : memref<4x16x256xf32, #tpu.memory_space<vmem>>, vector<1x16x256xf32>
    %27 = vector.shape_cast %26 : vector<1x16x256xf32> to vector<16x256xf32>
    %28 = vector.shape_cast %25 : vector<16x256xf32> to vector<1x16x256xf32>
    tpu.vector_store %arg5[%c2_28, %c0_29, %c0_30], %28 {strides = array<i32>} : memref<4x16x256xf32, #tpu.memory_space<vmem>>, vector<1x16x256xf32>,
    %cst_31 = arith.constant dense<0.000000e+00> : vector<16xf32>
    %29 = vector.multi_reduction <add>, %25, %cst_31 [1] : vector<16x256xf32> to vector<16xf32>
    %30 = vector.shape_cast %29 : vector<16xf32> to vector<16x1xf32>
    %31 = arith.addf %20, %30 : vector<16x1xf32>
    %c3 = arith.constant 3 : index
    %c0_32 = arith.constant 0 : index
    %c0_33 = arith.constant 0 : index
    %32 = vector.load %arg3[%c3, %c0_32, %c0_33] : memref<4x16x32xbf16, #tpu.memory_space<vmem>>, vector<1x16x32xbf16>
    %33 = vector.shape_cast %32 : vector<1x16x32xbf16> to vector<16x32xbf16>
    %c0_34 = arith.constant 0 : index
    %c3_35 = arith.constant 3 : index
    %c0_36 = arith.constant 0 : index
    %c0_37 = arith.constant 0 : index
    %34 = vector.load %arg2[%c0_34, %c3_35, %c0_36, %c0_37] : memref<1x4x32x256xbf16, #tpu.memory_space<vmem>>, vector<1x1x32x256xbf16>
    %35 = vector.shape_cast %34 : vector<1x1x32x256xbf16> to vector<32x256xbf16>
    %cst_38 = arith.constant dense<0.000000e+00> : vector<16x256xf32>
    %36 = tpu.matmul %33, %35, %cst_38 {dimension_numbers = #tpu.dot_dimension_numbers<[1], [0], [0], [1], [0, 0, 1, 1], [], []>} : vector<16x32xbf16>, vector<32x256xbf16>, vector<16x256xf32> -> vector<16x256xf32>
    %c3_39 = arith.constant 3 : index
    %c0_40 = arith.constant 0 : index
    %c0_41 = arith.constant 0 : index
    %37 = vector.load %arg5[%c3_39, %c0_40, %c0_41] : memref<4x16x256xf32, #tpu.memory_space<vmem>>, vector<1x16x256xf32>
    %38 = vector.shape_cast %37 : vector<1x16x256xf32> to vector<16x256xf32>
    %39 = vector.shape_cast %36 : vector<16x256xf32> to vector<1x16x256xf32>
    tpu.vector_store %arg5[%c3_39, %c0_40, %c0_41], %39 {strides = array<i32>} : memref<4x16x256xf32, #tpu.memory_space<vmem>>, vector<1x16x256xf32>,
    %cst_42 = arith.constant dense<0.000000e+00> : vector<16xf32>
    %40 = vector.multi_reduction <add>, %36, %cst_42 [1] : vector<16x256xf32> to vector<16xf32>
    %41 = vector.shape_cast %40 : vector<16xf32> to vector<16x1xf32>
    %42 = arith.addf %31, %41 : vector<16x1xf32>
    %cst_43 = arith.constant 9.765625E-4 : f32
    %43 = vector.broadcast %cst_43 : f32 to vector<16x1xf32>
    %44 = arith.mulf %42, %43 : vector<16x1xf32>
    %c0_44 = arith.constant 0 : index
    %c0_45 = arith.constant 0 : index
    %c0_46 = arith.constant 0 : index
    %45 = vector.load %arg5[%c0_44, %c0_45, %c0_46] : memref<4x16x256xf32, #tpu.memory_space<vmem>>, vector<1x16x256xf32>
    %46 = vector.shape_cast %45 : vector<1x16x256xf32> to vector<16x256xf32>
    %47 = vector.broadcast %44 : vector<16x1xf32> to vector<16x256xf32>
    %48 = arith.subf %46, %47 : vector<16x256xf32>
    %49 = arith.mulf %48, %48 : vector<16x256xf32>
    %cst_47 = arith.constant dense<0.000000e+00> : vector<16xf32>
    %50 = vector.multi_reduction <add>, %49, %cst_47 [1] : vector<16x256xf32> to vector<16xf32>
    %51 = vector.shape_cast %50 : vector<16xf32> to vector<16x1xf32>
    %c1_48 = arith.constant 1 : index
    %c0_49 = arith.constant 0 : index
    %c0_50 = arith.constant 0 : index
    %52 = vector.load %arg5[%c1_48, %c0_49, %c0_50] : memref<4x16x256xf32, #tpu.memory_space<vmem>>, vector<1x16x256xf32>
    %53 = vector.shape_cast %52 : vector<1x16x256xf32> to vector<16x256xf32>
    %54 = vector.broadcast %44 : vector<16x1xf32> to vector<16x256xf32>
    %55 = arith.subf %53, %54 : vector<16x256xf32>
    %56 = arith.mulf %55, %55 : vector<16x256xf32>
    %cst_51 = arith.constant dense<0.000000e+00> : vector<16xf32>
    %57 = vector.multi_reduction <add>, %56, %cst_51 [1] : vector<16x256xf32> to vector<16xf32>
    %58 = vector.shape_cast %57 : vector<16xf32> to vector<16x1xf32>
    %59 = arith.addf %51, %58 : vector<16x1xf32>
    %c2_52 = arith.constant 2 : index
    %c0_53 = arith.constant 0 : index
    %c0_54 = arith.constant 0 : index
    %60 = vector.load %arg5[%c2_52, %c0_53, %c0_54] : memref<4x16x256xf32, #tpu.memory_space<vmem>>, vector<1x16x256xf32>
    %61 = vector.shape_cast %60 : vector<1x16x256xf32> to vector<16x256xf32>
    %62 = vector.broadcast %44 : vector<16x1xf32> to vector<16x256xf32>
    %63 = arith.subf %61, %62 : vector<16x256xf32>
    %64 = arith.mulf %63, %63 : vector<16x256xf32>
    %cst_55 = arith.constant dense<0.000000e+00> : vector<16xf32>
    %65 = vector.multi_reduction <add>, %64, %cst_55 [1] : vector<16x256xf32> to vector<16xf32>
    %66 = vector.shape_cast %65 : vector<16xf32> to vector<16x1xf32>
    %67 = arith.addf %59, %66 : vector<16x1xf32>
    %c3_56 = arith.constant 3 : index
    %c0_57 = arith.constant 0 : index
    %c0_58 = arith.constant 0 : index
    %68 = vector.load %arg5[%c3_56, %c0_57, %c0_58] : memref<4x16x256xf32, #tpu.memory_space<vmem>>, vector<1x16x256xf32>
    %69 = vector.shape_cast %68 : vector<1x16x256xf32> to vector<16x256xf32>
    %70 = vector.broadcast %44 : vector<16x1xf32> to vector<16x256xf32>
    %71 = arith.subf %69, %70 : vector<16x256xf32>
    %72 = arith.mulf %71, %71 : vector<16x256xf32>
    %cst_59 = arith.constant dense<0.000000e+00> : vector<16xf32>
    %73 = vector.multi_reduction <add>, %72, %cst_59 [1] : vector<16x256xf32> to vector<16xf32>
    %74 = vector.shape_cast %73 : vector<16xf32> to vector<16x1xf32>
    %75 = arith.addf %67, %74 : vector<16x1xf32>
    %cst_60 = arith.constant 9.765625E-4 : f32
    %76 = vector.broadcast %cst_60 : f32 to vector<16x1xf32>
    %77 = arith.mulf %75, %76 : vector<16x1xf32>
    %cst_61 = arith.constant 0.000000e+00 : f32
    %78 = vector.broadcast %cst_61 : f32 to vector<16x1xf32>
    %79 = arith.maximumf %77, %78 : vector<16x1xf32>
    %cst_62 = arith.constant 9.99999974E-6 : f32
    %80 = vector.broadcast %cst_62 : f32 to vector<16x1xf32>
    %81 = arith.addf %79, %80 : vector<16x1xf32>
    %82 = math.rsqrt %81 : vector<16x1xf32>
    %c0_63 = arith.constant 0 : index
    %c0_64 = arith.constant 0 : index
    %c0_65 = arith.constant 0 : index
    %83 = vector.load %arg5[%c0_63, %c0_64, %c0_65] : memref<4x16x256xf32, #tpu.memory_space<vmem>>, vector<1x16x256xf32>
    %84 = vector.shape_cast %83 : vector<1x16x256xf32> to vector<16x256xf32>
    %85 = vector.broadcast %44 : vector<16x1xf32> to vector<16x256xf32>
    %86 = arith.subf %84, %85 : vector<16x256xf32>
    %87 = vector.broadcast %82 : vector<16x1xf32> to vector<16x256xf32>
    %88 = arith.mulf %86, %87 : vector<16x256xf32>
    %cst_66 = arith.constant 0.000000e+00 : f32
    %89 = vector.broadcast %cst_66 : f32 to vector<16x256xf32>
    %90 = arith.maximumf %88, %89 : vector<16x256xf32>
    %91 = arith.truncf %90 : vector<16x256xf32> to vector<16x256xbf16>
    %c0_67 = arith.constant 0 : index
    %c0_68 = arith.constant 0 : index
    %c0_69 = arith.constant 0 : index
    %c0_70 = arith.constant 0 : index
    %92 = vector.load %arg4[%c0_67, %c0_68, %c0_69, %c0_70] : memref<1x4x16x256xbf16, #tpu.memory_space<vmem>>, vector<1x1x16x256xbf16>
    %93 = vector.shape_cast %92 : vector<1x1x16x256xbf16> to vector<16x256xbf16>
    %94 = vector.shape_cast %91 : vector<16x256xbf16> to vector<1x1x16x256xbf16>
    tpu.vector_store %arg4[%c0_67, %c0_68, %c0_69, %c0_70], %94 {strides = array<i32>} : memref<1x4x16x256xbf16, #tpu.memory_space<vmem>>, vector<1x1x16x256xbf16>,
    %c1_71 = arith.constant 1 : index
    %c0_72 = arith.constant 0 : index
    %c0_73 = arith.constant 0 : index
    %95 = vector.load %arg5[%c1_71, %c0_72, %c0_73] : memref<4x16x256xf32, #tpu.memory_space<vmem>>, vector<1x16x256xf32>
    %96 = vector.shape_cast %95 : vector<1x16x256xf32> to vector<16x256xf32>
    %97 = vector.broadcast %44 : vector<16x1xf32> to vector<16x256xf32>
    %98 = arith.subf %96, %97 : vector<16x256xf32>
    %99 = vector.broadcast %82 : vector<16x1xf32> to vector<16x256xf32>
    %100 = arith.mulf %98, %99 : vector<16x256xf32>
    %cst_74 = arith.constant 0.000000e+00 : f32
    %101 = vector.broadcast %cst_74 : f32 to vector<16x256xf32>
    %102 = arith.maximumf %100, %101 : vector<16x256xf32>
    %103 = arith.truncf %102 : vector<16x256xf32> to vector<16x256xbf16>
    %c0_75 = arith.constant 0 : index
    %c1_76 = arith.constant 1 : index
    %c0_77 = arith.constant 0 : index
    %c0_78 = arith.constant 0 : index
    %104 = vector.load %arg4[%c0_75, %c1_76, %c0_77, %c0_78] : memref<1x4x16x256xbf16, #tpu.memory_space<vmem>>, vector<1x1x16x256xbf16>
    %105 = vector.shape_cast %104 : vector<1x1x16x256xbf16> to vector<16x256xbf16>
    %106 = vector.shape_cast %103 : vector<16x256xbf16> to vector<1x1x16x256xbf16>
    tpu.vector_store %arg4[%c0_75, %c1_76, %c0_77, %c0_78], %106 {strides = array<i32>} : memref<1x4x16x256xbf16, #tpu.memory_space<vmem>>, vector<1x1x16x256xbf16>,
    %c2_79 = arith.constant 2 : index
    %c0_80 = arith.constant 0 : index
    %c0_81 = arith.constant 0 : index
    %107 = vector.load %arg5[%c2_79, %c0_80, %c0_81] : memref<4x16x256xf32, #tpu.memory_space<vmem>>, vector<1x16x256xf32>
    %108 = vector.shape_cast %107 : vector<1x16x256xf32> to vector<16x256xf32>
    %109 = vector.broadcast %44 : vector<16x1xf32> to vector<16x256xf32>
    %110 = arith.subf %108, %109 : vector<16x256xf32>
    %111 = vector.broadcast %82 : vector<16x1xf32> to vector<16x256xf32>
    %112 = arith.mulf %110, %111 : vector<16x256xf32>
    %cst_82 = arith.constant 0.000000e+00 : f32
    %113 = vector.broadcast %cst_82 : f32 to vector<16x256xf32>
    %114 = arith.maximumf %112, %113 : vector<16x256xf32>
    %115 = arith.truncf %114 : vector<16x256xf32> to vector<16x256xbf16>
    %c0_83 = arith.constant 0 : index
    %c2_84 = arith.constant 2 : index
    %c0_85 = arith.constant 0 : index
    %c0_86 = arith.constant 0 : index
    %116 = vector.load %arg4[%c0_83, %c2_84, %c0_85, %c0_86] : memref<1x4x16x256xbf16, #tpu.memory_space<vmem>>, vector<1x1x16x256xbf16>
    %117 = vector.shape_cast %116 : vector<1x1x16x256xbf16> to vector<16x256xbf16>
    %118 = vector.shape_cast %115 : vector<16x256xbf16> to vector<1x1x16x256xbf16>
    tpu.vector_store %arg4[%c0_83, %c2_84, %c0_85, %c0_86], %118 {strides = array<i32>} : memref<1x4x16x256xbf16, #tpu.memory_space<vmem>>, vector<1x1x16x256xbf16>,
    %c3_87 = arith.constant 3 : index
    %c0_88 = arith.constant 0 : index
    %c0_89 = arith.constant 0 : index
    %119 = vector.load %arg5[%c3_87, %c0_88, %c0_89] : memref<4x16x256xf32, #tpu.memory_space<vmem>>, vector<1x16x256xf32>
    %120 = vector.shape_cast %119 : vector<1x16x256xf32> to vector<16x256xf32>
    %121 = vector.broadcast %44 : vector<16x1xf32> to vector<16x256xf32>
    %122 = arith.subf %120, %121 : vector<16x256xf32>
    %123 = vector.broadcast %82 : vector<16x1xf32> to vector<16x256xf32>
    %124 = arith.mulf %122, %123 : vector<16x256xf32>
    %cst_90 = arith.constant 0.000000e+00 : f32
    %125 = vector.broadcast %cst_90 : f32 to vector<16x256xf32>
    %126 = arith.maximumf %124, %125 : vector<16x256xf32>
    %127 = arith.truncf %126 : vector<16x256xf32> to vector<16x256xbf16>
    %c0_91 = arith.constant 0 : index
    %c3_92 = arith.constant 3 : index
    %c0_93 = arith.constant 0 : index
    %c0_94 = arith.constant 0 : index
    %128 = vector.load %arg4[%c0_91, %c3_92, %c0_93, %c0_94] : memref<1x4x16x256xbf16, #tpu.memory_space<vmem>>, vector<1x1x16x256xbf16>
    %129 = vector.shape_cast %128 : vector<1x1x16x256xbf16> to vector<16x256xbf16>
    %130 = vector.shape_cast %127 : vector<16x256xbf16> to vector<1x1x16x256xbf16>
    tpu.vector_store %arg4[%c0_91, %c3_92, %c0_93, %c0_94], %130 {strides = array<i32>} : memref<1x4x16x256xbf16, #tpu.memory_space<vmem>>, vector<1x1x16x256xbf16>,
    return
  }
  func.func @transform_0(%arg0: i32, %arg1: i32) -> (i32, i32, i32, i32) {
    %c0_i32 = arith.constant 0 : i32
    %c0_i32_0 = arith.constant 0 : i32
    %c0_i32_1 = arith.constant 0 : i32
    %c0_i32_2 = arith.constant 0 : i32
    return %arg0, %c0_i32, %c0_i32_0, %c0_i32_1 : i32, i32, i32, i32
  }
  func.func @transform_1(%arg0: i32, %arg1: i32) -> (i32, i32, i32) {
    %c0_i32 = arith.constant 0 : i32
    %c0_i32_0 = arith.constant 0 : i32
    %c0_i32_1 = arith.constant 0 : i32
    return %c0_i32, %arg1, %c0_i32_0 : i32, i32, i32
  }
  func.func @transform_2(%arg0: i32, %arg1: i32) -> (i32, i32, i32, i32) {
    %c0_i32 = arith.constant 0 : i32
    %c0_i32_0 = arith.constant 0 : i32
    %c0_i32_1 = arith.constant 0 : i32
    return %arg0, %c0_i32, %arg1, %c0_i32_0 : i32, i32, i32, i32
  }
}

</mosaic_0001>

<llo_original>
// kernel: tpu_custom_call.1
$region0: #{tpu_custom_call.1}
  #allocation0 [shape = 'u32[]', space=smem, size = 0x4, offset = 0x4, fixed_abs, tag = 'smem constant byte address 0x4 - core index']
  #allocation1 [shape = 'u32[144,128]{1,0:T(1,128)}', space=vmem, size = 0x12000, scoped, tag = 'internal scratch']
  #allocation2 [shape = 'f32[4,16,256]{2,1,0:T(8,128)}', space=vmem, size = 0x10000, scoped, tag = 'scratch operand']
  %s0 = inlined_call_operand.hbm [shape: bf16[2,4,32,256], index: 0, kind: input, shape index: {}]
  %s1 = inlined_call_operand.hbm [shape: bf16[4,16,32], index: 1, kind: input, shape index: {}]
  %s2 = inlined_call_operand.hbm [shape: bf16[2,4,16,256], index: 2, kind: output, shape index: {}]
  %s3 = sld [smem:[#allocation0]]
  $region49: #{tpu_custom_call.1} parent=0
    _
  %s5 = ssub.s32 1, %s3
  %s6 = scalar_select 0, %s5, %s3
  $region1: #{tpu_custom_call.1} parent=0
    #allocation3 [shape = 'u8[131072]{0}', space=vmem, size = 0x20000, scoped, tag = 'input window, operand 0']
    #allocation4 [shape = 's32[2]{0}', space=sflag, size = 0x8, scoped, tag = 'scoped memory for tpu_custom_call.1']
    #allocation5 [shape = 's32[2]{0}', space=sflag, size = 0x8, scoped, tag = 'scoped memory for tpu_custom_call.1']
    #allocation6 [shape = 'u8[16384]{0}', space=vmem, size = 0x4000, scoped, tag = 'input window, operand 1, single buffered']
    #allocation7 [shape = 's32[1]{0}', space=sflag, size = 0x4, scoped, tag = 'scoped memory for tpu_custom_call.1']
    #allocation8 [shape = 'u8[65536]{0}', space=vmem, size = 0x10000, scoped, tag = 'output window, operand 0']
    %7 = vsyncpa [#allocation4], 0
    %s8 = scalar_lea.sflag [#allocation4], 1
    %9 = vsyncpa %s8, 0
    %10 = vsyncpa [#allocation7], 0
    %11 = vsyncpa [#allocation5], 0
    %s12 = scalar_lea.sflag [#allocation5], 1
    %13 = vsyncpa %s12, 0
    loop: start=0, step=1, limit=4
    $region2: #{tpu_custom_call.1} parent=1 // loop_pre_header
      _
    $region3: #{tpu_custom_call.1} parent=1 // loop_header
      %s15 = sphi 0, %s19
      %p16 = scmp.ge.s32.totalorder %s15, 4
      %s22 = sphi 0, %s34
      %s23 = sphi 0, %s30
      %s24 = sphi 0, %s22
      %s25 = sphi 0, %s23
      %s26 = sphi 0, %s24
      %s27 = sphi 0, %s25
      %s37 = sphi 0, %s39
      %s40 = sphi 0, %s37
      %s41 = sphi 0, %s40
      %s57 = sphi 0, %s41
      %s63 = sphi 0, %s65
      %s66 = sphi 0, %s63
      %s67 = sphi 0, %s66
      %s83 = sphi 0, %s67
      %s91 = sphi 0, %s93
      %s94 = sphi 0, %s91
      %s95 = sphi 0, %s94
      %s111 = sphi 0, %s95
    $region4: #{tpu_custom_call.1} parent=1 // loop_header_branch
      %18 = sbr.rel (%p16) target = $region8
    $region5: #{tpu_custom_call.1} parent=1 // loop_body
      %s20 = ssub.s32 %s15, 1
      %s21 = ssub.s32 %s15, 2
      %s28 = sadd.s32 1, %s23
      %p29 = scmp.ge.s32.totalorder %s28, 1
      %s30 = scalar_select %p29, 0, %s28
      %s31 = sadd.s32 1, %s22
      %s32 = scalar_select %p29, %s31, %s22
      %p33 = scmp.ge.s32.totalorder %s32, 2
      %s34 = scalar_select %p33, 0, %s32
      %s35 = ssub.s32 %s22, %s34
      %p36 = scmp.eq.s32.totalorder %s35, 0
      %s38 = sadd.s32 %s37, 1
      %s39 = scalar_select %p36, %s37, %s38
      %p42 = pneg %p36
      %p43 = scmp.eq.s32.totalorder %s15, 1
      %p44 = por %p42, %p43
      %p45 = scmp.ne.s32.totalorder %s37, %s40
      %p46 = scmp.eq.s32.totalorder %s15, 0
      %p47 = por %p45, %p46
      %p48 = scmp.ne.s32.totalorder %s37, %s40
      %p49 = scmp.eq.s32.totalorder %s20, 1
      %p50 = por %p48, %p49
      %p51 = scmp.ne.s32.totalorder %s40, %s41
      %p52 = scmp.eq.s32.totalorder %s20, 0
      %p53 = por %p51, %p52
      %p54 = scmp.ne.s32.totalorder %s40, %s41
      %p55 = scmp.eq.s32.totalorder %s21, 1
      %p56 = por %p54, %p55
      %p58 = scmp.ne.s32.totalorder %s41, %s57
      %p59 = scmp.eq.s32.totalorder %s21, 0
      %p60 = por %p58, %p59
      %s61 = ssub.s32 %s23, %s30
      %p62 = scmp.eq.s32.totalorder %s61, 0
      %s64 = sadd.s32 %s63, 1
      %s65 = scalar_select %p62, %s63, %s64
      %p68 = pneg %p62
      %p69 = scmp.eq.s32.totalorder %s15, 1
      %p70 = por %p68, %p69
      %p71 = scmp.ne.s32.totalorder %s63, %s66
      %p72 = scmp.eq.s32.totalorder %s15, 0
      %p73 = por %p71, %p72
      %p74 = scmp.ne.s32.totalorder %s63, %s66
      %p75 = scmp.eq.s32.totalorder %s20, 1
      %p76 = por %p74, %p75
      %p77 = scmp.ne.s32.totalorder %s66, %s67
      %p78 = scmp.eq.s32.totalorder %s20, 0
      %p79 = por %p77, %p78
      %p80 = scmp.ne.s32.totalorder %s66, %s67
      %p81 = scmp.eq.s32.totalorder %s21, 1
      %p82 = por %p80, %p81
      %p84 = scmp.ne.s32.totalorder %s67, %s83
      %p85 = scmp.eq.s32.totalorder %s21, 0
      %p86 = por %p84, %p85
      %s87 = ssub.s32 %s22, %s34
      %s88 = ssub.s32 %s23, %s30
      %s89 = sor.u32 %s87, %s88
      %p90 = scmp.eq.s32.totalorder %s89, 0
      %s92 = sadd.s32 %s91, 1
      %s93 = scalar_select %p90, %s91, %s92
      %p96 = pneg %p90
      %p97 = scmp.eq.s32.totalorder %s15, 1
      %p98 = por %p96, %p97
      %p99 = scmp.ne.s32.totalorder %s91, %s94
      %p100 = scmp.eq.s32.totalorder %s15, 0
      %p101 = por %p99, %p100
      %p102 = scmp.ne.s32.totalorder %s91, %s94
      %p103 = scmp.eq.s32.totalorder %s20, 1
      %p104 = por %p102, %p103
      %p105 = scmp.ne.s32.totalorder %s94, %s95
      %p106 = scmp.eq.s32.totalorder %s20, 0
      %p107 = por %p105, %p106
      %p108 = scmp.ne.s32.totalorder %s94, %s95
      %p109 = scmp.eq.s32.totalorder %s21, 1
      %p110 = por %p108, %p109
      %p112 = scmp.ne.s32.totalorder %s95, %s111
      %p113 = scmp.eq.s32.totalorder %s21, 0
      %p114 = por %p112, %p113
      %p115 = scmp.le.s32.totalorder 1, %s15
      %p116 = scmp.lt.s32.totalorder %s15, 3
      %p117 = pnand %p115, %p116
      %p118 = pneg %p117
      // Predicated region
      $region9: #{tpu_custom_call.1} parent=5 // pred_check
        _
      $region10: #{tpu_custom_call.1} parent=5 // pred_check_branch
        %120 = sbr.rel (%p117) target = $region12
      $region11: #{tpu_custom_call.1} parent=5 // pred_region
        %s121 = ssub.s32 %s15, 1
        // Predicated region
        $region13: #{tpu_custom_call.1} parent=11 // pred_check
          %p122 = pneg %p79
        $region14: #{tpu_custom_call.1} parent=11 // pred_check_branch
          %124 = sbr.rel (%p122) target = $region16
        $region15: #{tpu_custom_call.1} parent=11 // pred_region
          %s125 = smul.u32 2, %s25
          %s127 = ssub.s32 512, 512
          %128 = vsyncadd [#allocation7], %s127
          %s129 = smul.addr %s125, 64
          %s130 = scalar_lea.hbm %s1, %s129
          %s131 = sshll.u32 [#allocation6], 4
          %s132 = int_to_ptr.vmem [resolvable:$true] %s131
          %137 = dma.hbm_to_vmem [thread:$0]  %s130, 512, %s132, [#allocation7], 64, 64, 4
        $region16: #{tpu_custom_call.1} parent=11 // pred_fallthru
          _
      $region12: #{tpu_custom_call.1} parent=5 // pred_fallthru
        _
      %p138 = scmp.lt.s32.totalorder %s15, 2
      // Predicated region
      $region17: #{tpu_custom_call.1} parent=5 // pred_check
        %p139 = pneg %p138
      $region18: #{tpu_custom_call.1} parent=5 // pred_check_branch
        %141 = sbr.rel (%p139) target = $region20
      $region19: #{tpu_custom_call.1} parent=5 // pred_region
        // Predicated region
        $region21: #{tpu_custom_call.1} parent=19 // pred_check
          %p142 = pneg %p47
        $region22: #{tpu_custom_call.1} parent=19 // pred_check_branch
          %144 = sbr.rel (%p142) target = $region24
        $region23: #{tpu_custom_call.1} parent=19 // pred_region
          %s145 = sand.u32 %s37, 1
          %s146 = scalar_lea.sflag [#allocation4], %s145
          %s147 = sand.u32 %s37, 1
          %s148 = smul.addr %s147, 128
          %s149 = scalar_lea.vmem [#allocation3], %s148
          %s151 = ssub.s32 2048, 2048
          %152 = vsyncadd %s146, %s151
          %s153 = smul.addr %s22, 32
          %s154 = smul.addr %s153, 64
          %s155 = scalar_lea.hbm %s0, %s154
          %s156 = sshll.u32 %s149, 4
          %s157 = int_to_ptr.vmem [resolvable:$true] %s156
          %162 = dma.hbm_to_vmem [thread:$0]  %s155, 2048, %s157, %s146, 128, 128, 8
        $region24: #{tpu_custom_call.1} parent=19 // pred_fallthru
          _
      $region20: #{tpu_custom_call.1} parent=5 // pred_fallthru
        _
      %p163 = scmp.le.s32.totalorder 1, %s15
      %p164 = scmp.lt.s32.totalorder %s15, 3
      %p165 = pnand %p163, %p164
      %p166 = pneg %p165
      // Predicated region
      $region25: #{tpu_custom_call.1} parent=5 // pred_check
        _
      $region26: #{tpu_custom_call.1} parent=5 // pred_check_branch
        %168 = sbr.rel (%p165) target = $region28
      $region27: #{tpu_custom_call.1} parent=5 // pred_region
        %s169 = ssub.s32 %s15, 1
        %s170 = sand.u32 %s40, 1
        %s171 = scalar_lea.sflag [#allocation4], %s170
        %s172 = sand.u32 %s40, 1
        %s173 = smul.addr %s172, 128
        %s174 = scalar_lea.vmem [#allocation3], %s173
        // Predicated region
        $region29: #{tpu_custom_call.1} parent=27 // pred_check
          %p175 = pneg %p53
        $region30: #{tpu_custom_call.1} parent=27 // pred_check_branch
          %177 = sbr.rel (%p175) target = $region32
        $region31: #{tpu_custom_call.1} parent=27 // pred_region
          %178 = dma.done %s171, 2048
        $region32: #{tpu_custom_call.1} parent=27 // pred_fallthru
          _
        // Predicated region
        $region33: #{tpu_custom_call.1} parent=27 // pred_check
          %p179 = pneg %p79
        $region34: #{tpu_custom_call.1} parent=27 // pred_check_branch
          %181 = sbr.rel (%p179) target = $region36
        $region35: #{tpu_custom_call.1} parent=27 // pred_region
          %182 = dma.done [#allocation7], 512
        $region36: #{tpu_custom_call.1} parent=27 // pred_fallthru
          _
        %s183 = sand.u32 %s40, 1
        %s184 = scalar_lea.sflag [#allocation4], %s183
        %s185 = sand.u32 %s40, 1
        %s186 = smul.addr %s185, 128
        %s187 = scalar_lea.vmem [#allocation3], %s186
        %p188 = pneg %p53
        %p189 = pneg %p50
        %p190 = pneg %p79
        %p191 = pneg %p76
        %p192 = pneg %p107
        %p193 = pneg %p104
        %s194 = sand.u32 %s94, 1
        %s195 = scalar_lea.sflag [#allocation5], %s194
        %s196 = sand.u32 %s94, 1
        %s197 = smul.addr %s196, 64
        %s198 = scalar_lea.vmem [#allocation8], %s197
        %s199 = smul.u32 2, %s25
        %s200 = smul.u32 2, %s25
        %v202 = vld [vmem:[#allocation6] sm:$0xf]
        %v203 = vld [vmem:[#allocation6 + $0x4] sm:$0xf]
        %v204 = vld [vmem:[%s174] sm:$0xff]
        %v205 = vld [vmem:[%s174 + $0x8] sm:$0xff]
        %v206 = vld [vmem:[%s174 + $0x10] sm:$0xff]
        %v207 = vld [vmem:[%s174 + $0x18] sm:$0xff]
        %v210 = vunpack.c.l.b16 %v202
        %v211 = vunpack.c.l.b16 %v203
        %v212 = vpack.c.b16 %v211, %v210
        %v217 = vunpack.c.l.b16 %v204
        %v218 = vunpack.c.h.b16 %v204
        %v219 = vunpack.c.l.b16 %v205
        %v220 = vunpack.c.h.b16 %v205
        %v221 = vunpack.c.l.b16 %v206
        %v222 = vunpack.c.h.b16 %v206
        %v223 = vunpack.c.l.b16 %v207
        %v224 = vunpack.c.h.b16 %v207
        %v225 = vpack.c.b16 %v219, %v217
        %v226 = vpack.c.b16 %v220, %v218
        %v227 = vpack.c.b16 %v223, %v221
        %v228 = vpack.c.b16 %v224, %v222
        %vm233 = vcmask 261120
        %v235 = vsel %vm233, %v212, 0
        %237 = vmatprep.subr.bf16.mxu0 %v226
        %238 = vmatpush1.bf16.msra.mxu0 %v225
        %239 = vmatprep.subr.bf16.mxu0 %v228
        %240 = vmatpush1.bf16.msra.mxu0 %v227
        %241 = vmatprep.subr.bf16.mxu0 0
        %242 = vmatpush1.bf16.msra.mxu0 0
        %243 = vmatprep.subr.bf16.mxu0 0
        %244 = vmatpush1.bf16.msra.mxu0 0
        %245 = vmatprep.subr.bf16.mxu0 0
        %246 = vmatpush1.bf16.msra.mxu0 0
        %247 = vmatprep.subr.bf16.mxu0 0
        %248 = vmatpush1.bf16.msra.mxu0 0
        %249 = vmatprep.subr.bf16.mxu0 0
        %250 = vmatpush1.bf16.msra.mxu0 0
        %251 = vmatprep.subr.bf16.mxu0 0
        %252 = vmatpush1.bf16.msra.mxu0 0
        %253 = vmatprep.subr.bf16.mxu0 0
        %254 = vmatpush1.bf16.msra.mxu0 0
        %255 = vmatprep.subr.bf16.mxu0 0
        %256 = vmatpush1.bf16.msra.mxu0 0
        %257 = vmatprep.subr.bf16.mxu0 0
        %258 = vmatpush1.bf16.msra.mxu0 0
        %259 = vmatprep.subr.bf16.mxu0 0
        %260 = vmatpush1.bf16.msra.mxu0 0
        %261 = vmatprep.subr.bf16.mxu0 0
        %262 = vmatpush1.bf16.msra.mxu0 0
        %263 = vmatprep.subr.bf16.mxu0 0
        %264 = vmatpush1.bf16.msra.mxu0 0
        %265 = vmatprep.subr.bf16.mxu0 0
        %266 = vmatpush1.bf16.msra.mxu0 0
        %267 = vmatprep.subr.bf16.mxu0 0
        %268 = vmatpush1.bf16.msra.mxu0 0
        %269 = vmatprep.mubr.bf16.mxu0 0
        %270 = vmatmul.mubr.bf16.gmra.mrb[0].mxu0 %v235
        %v271 = vpop.f32.mrb[0].mxu0
        %v272 = vadd.f32 0.0, %v271
        %v273 = vpop.f32.mrb[0].mxu0
        %v274 = vadd.f32 0.0, %v273
        %v275 = vpop.f32.mrb[0].mxu0
        %v276 = vadd.f32 0.0, %v275
        %v277 = vpop.f32.mrb[0].mxu0
        %v278 = vadd.f32 0.0, %v277
        %279 = vdwg.mxu0
        %280 = vst [vmem:[#allocation2] sm:$0xff] %v272
        %281 = vst [vmem:[#allocation2 + $0x8] sm:$0xff] %v274
        %282 = vst [vmem:[#allocation2 + $0x10] sm:$0xff] %v276
        %283 = vst [vmem:[#allocation2 + $0x18] sm:$0xff] %v278
        %v284 = vadd.f32 %v272, %v274
        %285 = vadd.xlane.f32.xlu0 %v284
        %v286 = vpop.xlane.xlu0 %285
        %v287 = vadd.f32 %v276, %v278
        %288 = vadd.xlane.f32.xlu0 %v287
        %v289 = vpop.xlane.xlu0 %288
        %s290 = scalar_lea.vmem [#allocation6], 8
        %v291 = vld [vmem:[%s290] sm:$0xf]
        %v292 = vld [vmem:[%s290 + $0x4] sm:$0xf]
        %s293 = scalar_lea.vmem %s174, 32 [#allocation3]
        %v294 = vld [vmem:[%s293] sm:$0xff]
        %v295 = vld [vmem:[%s293 + $0x8] sm:$0xff]
        %v296 = vld [vmem:[%s293 + $0x10] sm:$0xff]
        %v297 = vld [vmem:[%s293 + $0x18] sm:$0xff]
        %v300 = vunpack.c.l.b16 %v291
        %v301 = vunpack.c.l.b16 %v292
        %v302 = vpack.c.b16 %v301, %v300
        %v307 = vunpack.c.l.b16 %v294
        %v308 = vunpack.c.h.b16 %v294
        %v309 = vunpack.c.l.b16 %v295
        %v310 = vunpack.c.h.b16 %v295
        %v311 = vunpack.c.l.b16 %v296
        %v312 = vunpack.c.h.b16 %v296
        %v313 = vunpack.c.l.b16 %v297
        %v314 = vunpack.c.h.b16 %v297
        %v315 = vpack.c.b16 %v309, %v307
        %v316 = vpack.c.b16 %v310, %v308
        %v317 = vpack.c.b16 %v313, %v311
        %v318 = vpack.c.b16 %v314, %v312
        %v324 = vsel %vm233, %v302, 0
        %326 = vmatprep.subr.bf16.mxu0 %v316
        %327 = vmatpush1.bf16.msra.mxu0 %v315
        %328 = vmatprep.subr.bf16.mxu0 %v318
        %329 = vmatpush1.bf16.msra.mxu0 %v317
        %330 = vmatprep.subr.bf16.mxu0 0
        %331 = vmatpush1.bf16.msra.mxu0 0
        %332 = vmatprep.subr.bf16.mxu0 0
        %333 = vmatpush1.bf16.msra.mxu0 0
        %334 = vmatprep.subr.bf16.mxu0 0
        %335 = vmatpush1.bf16.msra.mxu0 0
        %336 = vmatprep.subr.bf16.mxu0 0
        %337 = vmatpush1.bf16.msra.mxu0 0
        %338 = vmatprep.subr.bf16.mxu0 0
        %339 = vmatpush1.bf16.msra.mxu0 0
        %340 = vmatprep.subr.bf16.mxu0 0
        %341 = vmatpush1.bf16.msra.mxu0 0
        %342 = vmatprep.subr.bf16.mxu0 0
        %343 = vmatpush1.bf16.msra.mxu0 0
        %344 = vmatprep.subr.bf16.mxu0 0
        %345 = vmatpush1.bf16.msra.mxu0 0
        %346 = vmatprep.subr.bf16.mxu0 0
        %347 = vmatpush1.bf16.msra.mxu0 0
        %348 = vmatprep.subr.bf16.mxu0 0
        %349 = vmatpush1.bf16.msra.mxu0 0
        %350 = vmatprep.subr.bf16.mxu0 0
        %351 = vmatpush1.bf16.msra.mxu0 0
        %352 = vmatprep.subr.bf16.mxu0 0
        %353 = vmatpush1.bf16.msra.mxu0 0
        %354 = vmatprep.subr.bf16.mxu0 0
        %355 = vmatpush1.bf16.msra.mxu0 0
        %356 = vmatprep.subr.bf16.mxu0 0
        %357 = vmatpush1.bf16.msra.mxu0 0
        %358 = vmatprep.mubr.bf16.mxu0 0
        %359 = vmatmul.mubr.bf16.gmra.mrb[0].mxu0 %v324
        %v360 = vpop.f32.mrb[0].mxu0
        %v361 = vadd.f32 0.0, %v360
        %v362 = vpop.f32.mrb[0].mxu0
        %v363 = vadd.f32 0.0, %v362
        %v364 = vpop.f32.mrb[0].mxu0
        %v365 = vadd.f32 0.0, %v364
        %v366 = vpop.f32.mrb[0].mxu0
        %v367 = vadd.f32 0.0, %v366
        %368 = vdwg.mxu0
        %s369 = scalar_lea.vmem [#allocation2], 32
        %370 = vst [vmem:[%s369] sm:$0xff] %v361
        %371 = vst [vmem:[%s369 + $0x8] sm:$0xff] %v363
        %372 = vst [vmem:[%s369 + $0x10] sm:$0xff] %v365
        %373 = vst [vmem:[%s369 + $0x18] sm:$0xff] %v367
        %v374 = vadd.f32 %v361, %v363
        %375 = vadd.xlane.f32.xlu0 %v374
        %v376 = vpop.xlane.xlu0 %375
        %v377 = vadd.f32 %v365, %v367
        %378 = vadd.xlane.f32.xlu0 %v377
        %v379 = vpop.xlane.xlu0 %378
        %v380 = vadd.f32 %v286, %v376
        %v381 = vadd.f32 %v289, %v379
        %s382 = scalar_lea.vmem [#allocation6], 16
        %v383 = vld [vmem:[%s382] sm:$0xf]
        %v384 = vld [vmem:[%s382 + $0x4] sm:$0xf]
        %s385 = scalar_lea.vmem %s174, 64 [#allocation3]
        %v386 = vld [vmem:[%s385] sm:$0xff]
        %v387 = vld [vmem:[%s385 + $0x8] sm:$0xff]
        %v388 = vld [vmem:[%s385 + $0x10] sm:$0xff]
        %v389 = vld [vmem:[%s385 + $0x18] sm:$0xff]
        %v392 = vunpack.c.l.b16 %v383
        %v393 = vunpack.c.l.b16 %v384
        %v394 = vpack.c.b16 %v393, %v392
        %v399 = vunpack.c.l.b16 %v386
        %v400 = vunpack.c.h.b16 %v386
        %v401 = vunpack.c.l.b16 %v387
        %v402 = vunpack.c.h.b16 %v387
        %v403 = vunpack.c.l.b16 %v388
        %v404 = vunpack.c.h.b16 %v388
        %v405 = vunpack.c.l.b16 %v389
        %v406 = vunpack.c.h.b16 %v389
        %v407 = vpack.c.b16 %v401, %v399
        %v408 = vpack.c.b16 %v402, %v400
        %v409 = vpack.c.b16 %v405, %v403
        %v410 = vpack.c.b16 %v406, %v404
        %v416 = vsel %vm233, %v394, 0
        %418 = vmatprep.subr.bf16.mxu0 %v408
        %419 = vmatpush1.bf16.msra.mxu0 %v407
        %420 = vmatprep.subr.bf16.mxu0 %v410
        %421 = vmatpush1.bf16.msra.mxu0 %v409
        %422 = vmatprep.subr.bf16.mxu0 0
        %423 = vmatpush1.bf16.msra.mxu0 0
        %424 = vmatprep.subr.bf16.mxu0 0
        %425 = vmatpush1.bf16.msra.mxu0 0
        %426 = vmatprep.subr.bf16.mxu0 0
        %427 = vmatpush1.bf16.msra.mxu0 0
        %428 = vmatprep.subr.bf16.mxu0 0
        %429 = vmatpush1.bf16.msra.mxu0 0
        %430 = vmatprep.subr.bf16.mxu0 0
        %431 = vmatpush1.bf16.msra.mxu0 0
        %432 = vmatprep.subr.bf16.mxu0 0
        %433 = vmatpush1.bf16.msra.mxu0 0
        %434 = vmatprep.subr.bf16.mxu0 0
        %435 = vmatpush1.bf16.msra.mxu0 0
        %436 = vmatprep.subr.bf16.mxu0 0
        %437 = vmatpush1.bf16.msra.mxu0 0
        %438 = vmatprep.subr.bf16.mxu0 0
        %439 = vmatpush1.bf16.msra.mxu0 0
        %440 = vmatprep.subr.bf16.mxu0 0
        %441 = vmatpush1.bf16.msra.mxu0 0
        %442 = vmatprep.subr.bf16.mxu0 0
        %443 = vmatpush1.bf16.msra.mxu0 0
        %444 = vmatprep.subr.bf16.mxu0 0
        %445 = vmatpush1.bf16.msra.mxu0 0
        %446 = vmatprep.subr.bf16.mxu0 0
        %447 = vmatpush1.bf16.msra.mxu0 0
        %448 = vmatprep.subr.bf16.mxu0 0
        %449 = vmatpush1.bf16.msra.mxu0 0
        %450 = vmatprep.mubr.bf16.mxu0 0
        %451 = vmatmul.mubr.bf16.gmra.mrb[0].mxu0 %v416
        %v452 = vpop.f32.mrb[0].mxu0
        %v453 = vadd.f32 0.0, %v452
        %v454 = vpop.f32.mrb[0].mxu0
        %v455 = vadd.f32 0.0, %v454
        %v456 = vpop.f32.mrb[0].mxu0
        %v457 = vadd.f32 0.0, %v456
        %v458 = vpop.f32.mrb[0].mxu0
        %v459 = vadd.f32 0.0, %v458
        %460 = vdwg.mxu0
        %s461 = scalar_lea.vmem [#allocation2], 64
        %462 = vst [vmem:[%s461] sm:$0xff] %v453
        %463 = vst [vmem:[%s461 + $0x8] sm:$0xff] %v455
        %464 = vst [vmem:[%s461 + $0x10] sm:$0xff] %v457
        %465 = vst [vmem:[%s461 + $0x18] sm:$0xff] %v459
        %v466 = vadd.f32 %v453, %v455
        %467 = vadd.xlane.f32.xlu0 %v466
        %v468 = vpop.xlane.xlu0 %467
        %v469 = vadd.f32 %v457, %v459
        %470 = vadd.xlane.f32.xlu0 %v469
        %v471 = vpop.xlane.xlu0 %470
        %v472 = vadd.f32 %v380, %v468
        %v473 = vadd.f32 %v381, %v471
        %s474 = scalar_lea.vmem [#allocation6], 24
        %v475 = vld [vmem:[%s474] sm:$0xf]
        %v476 = vld [vmem:[%s474 + $0x4] sm:$0xf]
        %s477 = scalar_lea.vmem %s174, 96 [#allocation3]
        %v478 = vld [vmem:[%s477] sm:$0xff]
        %v479 = vld [vmem:[%s477 + $0x8] sm:$0xff]
        %v480 = vld [vmem:[%s477 + $0x10] sm:$0xff]
        %v481 = vld [vmem:[%s477 + $0x18] sm:$0xff]
        %v484 = vunpack.c.l.b16 %v475
        %v485 = vunpack.c.l.b16 %v476
        %v486 = vpack.c.b16 %v485, %v484
        %v491 = vunpack.c.l.b16 %v478
        %v492 = vunpack.c.h.b16 %v478
        %v493 = vunpack.c.l.b16 %v479
        %v494 = vunpack.c.h.b16 %v479
        %v495 = vunpack.c.l.b16 %v480
        %v496 = vunpack.c.h.b16 %v480
        %v497 = vunpack.c.l.b16 %v481
        %v498 = vunpack.c.h.b16 %v481
        %v499 = vpack.c.b16 %v493, %v491
        %v500 = vpack.c.b16 %v494, %v492
        %v501 = vpack.c.b16 %v497, %v495
        %v502 = vpack.c.b16 %v498, %v496
        %v508 = vsel %vm233, %v486, 0
        %510 = vmatprep.subr.bf16.mxu0 %v500
        %511 = vmatpush1.bf16.msra.mxu0 %v499
        %512 = vmatprep.subr.bf16.mxu0 %v502
        %513 = vmatpush1.bf16.msra.mxu0 %v501
        %514 = vmatprep.subr.bf16.mxu0 0
        %515 = vmatpush1.bf16.msra.mxu0 0
        %516 = vmatprep.subr.bf16.mxu0 0
        %517 = vmatpush1.bf16.msra.mxu0 0
        %518 = vmatprep.subr.bf16.mxu0 0
        %519 = vmatpush1.bf16.msra.mxu0 0
        %520 = vmatprep.subr.bf16.mxu0 0
        %521 = vmatpush1.bf16.msra.mxu0 0
        %522 = vmatprep.subr.bf16.mxu0 0
        %523 = vmatpush1.bf16.msra.mxu0 0
        %524 = vmatprep.subr.bf16.mxu0 0
        %525 = vmatpush1.bf16.msra.mxu0 0
        %526 = vmatprep.subr.bf16.mxu0 0
        %527 = vmatpush1.bf16.msra.mxu0 0
        %528 = vmatprep.subr.bf16.mxu0 0
        %529 = vmatpush1.bf16.msra.mxu0 0
        %530 = vmatprep.subr.bf16.mxu0 0
        %531 = vmatpush1.bf16.msra.mxu0 0
        %532 = vmatprep.subr.bf16.mxu0 0
        %533 = vmatpush1.bf16.msra.mxu0 0
        %534 = vmatprep.subr.bf16.mxu0 0
        %535 = vmatpush1.bf16.msra.mxu0 0
        %536 = vmatprep.subr.bf16.mxu0 0
        %537 = vmatpush1.bf16.msra.mxu0 0
        %538 = vmatprep.subr.bf16.mxu0 0
        %539 = vmatpush1.bf16.msra.mxu0 0
        %540 = vmatprep.subr.bf16.mxu0 0
        %541 = vmatpush1.bf16.msra.mxu0 0
        %542 = vmatprep.mubr.bf16.mxu0 0
        %543 = vmatmul.mubr.bf16.gmra.mrb[0].mxu0 %v508
        %v544 = vpop.f32.mrb[0].mxu0
        %v545 = vadd.f32 0.0, %v544
        %v546 = vpop.f32.mrb[0].mxu0
        %v547 = vadd.f32 0.0, %v546
        %v548 = vpop.f32.mrb[0].mxu0
        %v549 = vadd.f32 0.0, %v548
        %v550 = vpop.f32.mrb[0].mxu0
        %v551 = vadd.f32 0.0, %v550
        %552 = vdwg.mxu0
        %s553 = scalar_lea.vmem [#allocation2], 96
        %554 = vst [vmem:[%s553] sm:$0xff] %v545
        %555 = vst [vmem:[%s553 + $0x8] sm:$0xff] %v547
        %556 = vst [vmem:[%s553 + $0x10] sm:$0xff] %v549
        %557 = vst [vmem:[%s553 + $0x18] sm:$0xff] %v551
        %v558 = vadd.f32 %v545, %v547
        %559 = vadd.xlane.f32.xlu0 %v558
        %v560 = vpop.xlane.xlu0 %559
        %v561 = vadd.f32 %v549, %v551
        %562 = vadd.xlane.f32.xlu0 %v561
        %v563 = vpop.xlane.xlu0 %562
        %v564 = vadd.f32 %v472, %v560
        %v565 = vadd.f32 %v473, %v563
        %v566 = vmul.f32 %v564, 0.0009765625
        %v567 = vmul.f32 %v565, 0.0009765625
        %v568 = vld [vmem:[#allocation2] sm:$0xff]
        %v569 = vld [vmem:[#allocation2 + $0x8] sm:$0xff]
        %v570 = vld [vmem:[#allocation2 + $0x10] sm:$0xff]
        %v571 = vld [vmem:[#allocation2 + $0x18] sm:$0xff]
        %v572 = vsub.f32 %v568, %v566
        %v573 = vsub.f32 %v569, %v566
        %v574 = vsub.f32 %v570, %v567
        %v575 = vsub.f32 %v571, %v567
        %v576 = vmul.f32 %v572, %v572
        %v577 = vmul.f32 %v573, %v573
        %v578 = vmul.f32 %v574, %v574
        %v579 = vmul.f32 %v575, %v575
        %v580 = vadd.f32 %v576, %v577
        %581 = vadd.xlane.f32.xlu0 %v580
        %v582 = vpop.xlane.xlu0 %581
        %v583 = vadd.f32 %v578, %v579
        %584 = vadd.xlane.f32.xlu0 %v583
        %v585 = vpop.xlane.xlu0 %584
        %v586 = vld [vmem:[%s369] sm:$0xff]
        %v587 = vld [vmem:[%s369 + $0x8] sm:$0xff]
        %v588 = vld [vmem:[%s369 + $0x10] sm:$0xff]
        %v589 = vld [vmem:[%s369 + $0x18] sm:$0xff]
        %v590 = vsub.f32 %v586, %v566
        %v591 = vsub.f32 %v587, %v566
        %v592 = vsub.f32 %v588, %v567
        %v593 = vsub.f32 %v589, %v567
        %v594 = vmul.f32 %v590, %v590
        %v595 = vmul.f32 %v591, %v591
        %v596 = vmul.f32 %v592, %v592
        %v597 = vmul.f32 %v593, %v593
        %v598 = vadd.f32 %v594, %v595
        %599 = vadd.xlane.f32.xlu0 %v598
        %v600 = vpop.xlane.xlu0 %599
        %v601 = vadd.f32 %v596, %v597
        %602 = vadd.xlane.f32.xlu0 %v601
        %v603 = vpop.xlane.xlu0 %602
        %v604 = vadd.f32 %v582, %v600
        %v605 = vadd.f32 %v585, %v603
        %v606 = vld [vmem:[%s461] sm:$0xff]
        %v607 = vld [vmem:[%s461 + $0x8] sm:$0xff]
        %v608 = vld [vmem:[%s461 + $0x10] sm:$0xff]
        %v609 = vld [vmem:[%s461 + $0x18] sm:$0xff]
        %v610 = vsub.f32 %v606, %v566
        %v611 = vsub.f32 %v607, %v566
        %v612 = vsub.f32 %v608, %v567
        %v613 = vsub.f32 %v609, %v567
        %v614 = vmul.f32 %v610, %v610
        %v615 = vmul.f32 %v611, %v611
        %v616 = vmul.f32 %v612, %v612
        %v617 = vmul.f32 %v613, %v613
        %v618 = vadd.f32 %v614, %v615
        %619 = vadd.xlane.f32.xlu0 %v618
        %v620 = vpop.xlane.xlu0 %619
        %v621 = vadd.f32 %v616, %v617
        %622 = vadd.xlane.f32.xlu0 %v621
        %v623 = vpop.xlane.xlu0 %622
        %v624 = vadd.f32 %v604, %v620
        %v625 = vadd.f32 %v605, %v623
        %v626 = vld [vmem:[%s553] sm:$0xff]
        %v627 = vld [vmem:[%s553 + $0x8] sm:$0xff]
        %v628 = vld [vmem:[%s553 + $0x10] sm:$0xff]
        %v629 = vld [vmem:[%s553 + $0x18] sm:$0xff]
        %v630 = vsub.f32 %v626, %v566
        %v631 = vsub.f32 %v627, %v566
        %v632 = vsub.f32 %v628, %v567
        %v633 = vsub.f32 %v629, %v567
        %v634 = vmul.f32 %v630, %v630
        %v635 = vmul.f32 %v631, %v631
        %v636 = vmul.f32 %v632, %v632
        %v637 = vmul.f32 %v633, %v633
        %v638 = vadd.f32 %v634, %v635
        %639 = vadd.xlane.f32.xlu0 %v638
        %v640 = vpop.xlane.xlu0 %639
        %v641 = vadd.f32 %v636, %v637
        %642 = vadd.xlane.f32.xlu0 %v641
        %v643 = vpop.xlane.xlu0 %642
        %v644 = vadd.f32 %v624, %v640
        %v645 = vadd.f32 %v625, %v643
        %v646 = vmul.f32 %v644, 0.0009765625
        %v647 = vmul.f32 %v645, 0.0009765625
        %v648 = vmax.f32 %v646, 0.0
        %v649 = vmax.f32 %v647, 0.0
        %v650 = vadd.f32 %v648, 1e-05
        %v651 = vadd.f32 %v649, 1e-05
        %v652 = vrsqrt.pop %v650
        %v653 = vrsqrt.pop %v651
        %v654 = vmul.f32 %v572, %v652
        %v655 = vmul.f32 %v573, %v652
        %v656 = vmul.f32 %v574, %v653
        %v657 = vmul.f32 %v575, %v653
        %v658 = vmax.f32 %v654, 0.0
        %v659 = vmax.f32 %v655, 0.0
        %v660 = vmax.f32 %v656, 0.0
        %v661 = vmax.f32 %v657, 0.0
        %v662 = vpack.c.bf16 %v660, %v658
        %v663 = vpack.c.bf16 %v661, %v659
        %v666 = vunpack.c.l.b16 %v662
        %v667 = vunpack.c.l.b16 %v663
        %v668 = vunpack.c.h.b16 %v662
        %v669 = vunpack.c.h.b16 %v663
        %v670 = vpack.c.b16 %v667, %v666
        %v671 = vpack.c.b16 %v669, %v668
        %674 = vst [vmem:[%s198] sm:$0xff] %v670
        %675 = vst [vmem:[%s198 + $0x8] sm:$0xff] %v671
        %v676 = vld [vmem:[%s369] sm:$0xff]
        %v677 = vld [vmem:[%s369 + $0x8] sm:$0xff]
        %v678 = vld [vmem:[%s369 + $0x10] sm:$0xff]
        %v679 = vld [vmem:[%s369 + $0x18] sm:$0xff]
        %v680 = vsub.f32 %v676, %v566
        %v681 = vsub.f32 %v677, %v566
        %v682 = vsub.f32 %v678, %v567
        %v683 = vsub.f32 %v679, %v567
        %v684 = vmul.f32 %v680, %v652
        %v685 = vmul.f32 %v681, %v652
        %v686 = vmul.f32 %v682, %v653
        %v687 = vmul.f32 %v683, %v653
        %v688 = vmax.f32 %v684, 0.0
        %v689 = vmax.f32 %v685, 0.0
        %v690 = vmax.f32 %v686, 0.0
        %v691 = vmax.f32 %v687, 0.0
        %v692 = vpack.c.bf16 %v690, %v688
        %v693 = vpack.c.bf16 %v691, %v689
        %v696 = vunpack.c.l.b16 %v692
        %v697 = vunpack.c.l.b16 %v693
        %v698 = vunpack.c.h.b16 %v692
        %v699 = vunpack.c.h.b16 %v693
        %v700 = vpack.c.b16 %v697, %v696
        %v701 = vpack.c.b16 %v699, %v698
        %s704 = scalar_lea.vmem %s198, 16 [#allocation8]
        %705 = vst [vmem:[%s704] sm:$0xff] %v700
        %706 = vst [vmem:[%s704 + $0x8] sm:$0xff] %v701
        %v707 = vld [vmem:[%s461] sm:$0xff]
        %v708 = vld [vmem:[%s461 + $0x8] sm:$0xff]
        %v709 = vld [vmem:[%s461 + $0x10] sm:$0xff]
        %v710 = vld [vmem:[%s461 + $0x18] sm:$0xff]
        %v711 = vsub.f32 %v707, %v566
        %v712 = vsub.f32 %v708, %v566
        %v713 = vsub.f32 %v709, %v567
        %v714 = vsub.f32 %v710, %v567
        %v715 = vmul.f32 %v711, %v652
        %v716 = vmul.f32 %v712, %v652
        %v717 = vmul.f32 %v713, %v653
        %v718 = vmul.f32 %v714, %v653
        %v719 = vmax.f32 %v715, 0.0
        %v720 = vmax.f32 %v716, 0.0
        %v721 = vmax.f32 %v717, 0.0
        %v722 = vmax.f32 %v718, 0.0
        %v723 = vpack.c.bf16 %v721, %v719
        %v724 = vpack.c.bf16 %v722, %v720
        %v727 = vunpack.c.l.b16 %v723
        %v728 = vunpack.c.l.b16 %v724
        %v729 = vunpack.c.h.b16 %v723
        %v730 = vunpack.c.h.b16 %v724
        %v731 = vpack.c.b16 %v728, %v727
        %v732 = vpack.c.b16 %v730, %v729
        %s735 = scalar_lea.vmem %s198, 32 [#allocation8]
        %736 = vst [vmem:[%s735] sm:$0xff] %v731
        %737 = vst [vmem:[%s735 + $0x8] sm:$0xff] %v732
        %v738 = vld [vmem:[%s553] sm:$0xff]
        %v739 = vld [vmem:[%s553 + $0x8] sm:$0xff]
        %v740 = vld [vmem:[%s553 + $0x10] sm:$0xff]
        %v741 = vld [vmem:[%s553 + $0x18] sm:$0xff]
        %v742 = vsub.f32 %v738, %v566
        %v743 = vsub.f32 %v739, %v566
        %v744 = vsub.f32 %v740, %v567
        %v745 = vsub.f32 %v741, %v567
        %v746 = vmul.f32 %v742, %v652
        %v747 = vmul.f32 %v743, %v652
        %v748 = vmul.f32 %v744, %v653
        %v749 = vmul.f32 %v745, %v653
        %v750 = vmax.f32 %v746, 0.0
        %v751 = vmax.f32 %v747, 0.0
        %v752 = vmax.f32 %v748, 0.0
        %v753 = vmax.f32 %v749, 0.0
        %v754 = vpack.c.bf16 %v752, %v750
        %v755 = vpack.c.bf16 %v753, %v751
        %v758 = vunpack.c.l.b16 %v754
        %v759 = vunpack.c.l.b16 %v755
        %v760 = vunpack.c.h.b16 %v754
        %v761 = vunpack.c.h.b16 %v755
        %v762 = vpack.c.b16 %v759, %v758
        %v763 = vpack.c.b16 %v761, %v760
        %s766 = scalar_lea.vmem %s198, 48 [#allocation8]
        %767 = vst [vmem:[%s766] sm:$0xff] %v762
        %768 = vst [vmem:[%s766 + $0x8] sm:$0xff] %v763
        %s769 = sand.u32 %s94, 1
        %s770 = scalar_lea.sflag [#allocation5], %s769
        %s771 = sand.u32 %s94, 1
        %s772 = smul.addr %s771, 64
        %s773 = scalar_lea.vmem [#allocation8], %s772
        // Predicated region
        $region37: #{tpu_custom_call.1} parent=27 // pred_check
          %p774 = pneg %p104
        $region38: #{tpu_custom_call.1} parent=27 // pred_check_branch
          %776 = sbr.rel (%p774) target = $region40
        $region39: #{tpu_custom_call.1} parent=27 // pred_region
          %s777 = smul.u32 2, %s25
          %s779 = ssub.s32 1024, 1024
          %780 = vsyncadd %s770, %s779
          %s781 = smul.addr %s777, 2
          %s782 = smul.addr %s24, 16
          %s783 = sadd.s32 %s781, %s782
          %s784 = smul.addr %s783, 64
          %s785 = scalar_lea.hbm %s2, %s784
          %s786 = sshll.u32 %s773, 4
          %s787 = int_to_ptr.vmem [resolvable:$true] %s786
          %792 = dma.vmem_to_hbm [thread:$0]  %s787, 1024, %s785, %s770, 128, 128, 8
        $region40: #{tpu_custom_call.1} parent=27 // pred_fallthru
          _
      $region28: #{tpu_custom_call.1} parent=5 // pred_fallthru
        _
      %p793 = scmp.le.s32.totalorder 2, %s15
      // Predicated region
      $region41: #{tpu_custom_call.1} parent=5 // pred_check
        %p794 = pneg %p793
      $region42: #{tpu_custom_call.1} parent=5 // pred_check_branch
        %796 = sbr.rel (%p794) target = $region44
      $region43: #{tpu_custom_call.1} parent=5 // pred_region
        %s797 = ssub.s32 %s15, 2
        // Predicated region
        $region45: #{tpu_custom_call.1} parent=43 // pred_check
          %p798 = pneg %p110
        $region46: #{tpu_custom_call.1} parent=43 // pred_check_branch
          %800 = sbr.rel (%p798) target = $region48
        $region47: #{tpu_custom_call.1} parent=43 // pred_region
          %s801 = sand.u32 %s95, 1
          %s802 = scalar_lea.sflag [#allocation5], %s801
          %s803 = sand.u32 %s95, 1
          %s804 = smul.addr %s803, 64
          %s805 = scalar_lea.vmem [#allocation8], %s804
          %806 = dma.done %s802, 1024
        $region48: #{tpu_custom_call.1} parent=43 // pred_fallthru
          _
      $region44: #{tpu_custom_call.1} parent=5 // pred_fallthru
        _
    $region6: #{tpu_custom_call.1} parent=1 // loop_footer
      %s19 = sadd.s32 1, %s15
    $region7: #{tpu_custom_call.1} parent=1 // loop_footer_branch
      %14 = sbr.rel target = $region3
    $region8: #{tpu_custom_call.1} parent=1 // loop_exit
      _
    %807 = vsyncpa [#allocation4], 1
    %s808 = scalar_lea.sflag [#allocation4], 1
    %809 = vsyncpa %s808, 1
    %810 = vsyncpa [#allocation7], 1
    %811 = vsyncpa [#allocation5], 1
    %s812 = scalar_lea.sflag [#allocation5], 1
    %813 = vsyncpa %s812, 1

</llo_original>
